<compile_context>
chip_gen: v7x
topology: tpu7x:2x2x1
jax: 0.10.0
libtpu: 0.0.40
codegen_flags: <defaults>
</compile_context>

<pallas_src>
import jax
import jax.numpy as jnp
from jax.experimental import pallas as pl
from jax.experimental.pallas import tpu as pltpu

EPS = 1e-5  # PyTorch BatchNorm2d default eps


# ---------------------------------------------------------------------------
# Pallas kernel: K-tiled matmul + fused bias (+ residual) (+ ReLU) epilogue
# ---------------------------------------------------------------------------
def _make_matmul_kernel(relu: bool, has_residual: bool):
    """(tm, tk) @ (tk, Cout) accumulated over the K grid axis into a VMEM f32
    scratch; the epilogue (bias add, optional residual add, optional ReLU,
    output cast) runs only at the last K step."""

    def kernel(*refs):
        if has_residual:
            p_ref, w_ref, b_ref, r_ref, o_ref, acc_ref = refs
        else:
            p_ref, w_ref, b_ref, o_ref, acc_ref = refs
            r_ref = None

        k = pl.program_id(1)

        @pl.when(k == 0)
        def _init():
            acc_ref[...] = jnp.zeros_like(acc_ref)

        acc_ref[...] += jnp.dot(p_ref[...], w_ref[...],
                                preferred_element_type=jnp.float32)

        @pl.when(k == pl.num_programs(1) - 1)
        def _epilogue():
            out = acc_ref[...] + b_ref[...]
            if has_residual:
                out = out + r_ref[...].astype(jnp.float32)
            if relu:
                out = jnp.maximum(out, 0.0)
            o_ref[...] = out.astype(o_ref.dtype)

    return kernel


# ---------------------------------------------------------------------------
# pallas_call wrapper
# ---------------------------------------------------------------------------
def _round_up(x, m):
    return ((x + m - 1) // m) * m


def _pad2d(a, rows, cols):
    return jnp.pad(a, ((0, rows - a.shape[0]), (0, cols - a.shape[1])))


def _fused_matmul(patches, w, bias, *, residual=None, relu=False,
                  out_dtype=jnp.float32, compute_dtype=jnp.bfloat16,
                  tm_target=512, tk_target=512):
    """out = patches @ w + bias [+ residual] [ReLU], with M/K/Cout zero-padded
    so every block is (8,128)-aligned, K tiled on an 'arbitrary' reduction grid
    axis, and the output last dim kept lane-dense (multiple of 128)."""
    M, K = patches.shape
    Cout = w.shape[1]

    tm = min(tm_target, _round_up(M, 128))
    m_pad = _round_up(M, tm)
    tk = min(tk_target, _round_up(K, 128))
    k_pad = _round_up(K, tk)
    n_pad = _round_up(Cout, 128)

    p = _pad2d(patches.astype(compute_dtype), m_pad, k_pad)
    wp = _pad2d(w.astype(compute_dtype), k_pad, n_pad)
    bp = _pad2d(bias.reshape(1, Cout).astype(jnp.float32), 1, n_pad)

    in_specs = [
        pl.BlockSpec((tm, tk), lambda i, k: (i, k)),
        pl.BlockSpec((tk, n_pad), lambda i, k: (k, 0)),
        pl.BlockSpec((1, n_pad), lambda i, k: (0, 0)),
    ]
    args = [p, wp, bp]
    if residual is not None:
        rp = _pad2d(residual.astype(compute_dtype), m_pad, n_pad)
        in_specs.append(pl.BlockSpec((tm, n_pad), lambda i, k: (i, 0)))
        args.append(rp)

    out = pl.pallas_call(
        _make_matmul_kernel(relu, residual is not None),
        out_shape=jax.ShapeDtypeStruct((m_pad, n_pad), out_dtype),
        grid=(m_pad // tm, k_pad // tk),
        in_specs=in_specs,
        out_specs=pl.BlockSpec((tm, n_pad), lambda i, k: (i, 0)),
        scratch_shapes=[pltpu.VMEM((tm, n_pad), jnp.float32)],
        compiler_params=pltpu.CompilerParams(
            dimension_semantics=("parallel", "arbitrary"),
            vmem_limit_bytes=32 * 1024 * 1024,
        ),
    )(*args)
    return out[:M, :Cout]


# ---------------------------------------------------------------------------
# Glue: im2col, BN folding, weight flattening, parameter init, forward pass
# ---------------------------------------------------------------------------
def _im2col3x3(x_nhwc, stride):
    # x_nhwc: [N, H, W, C] -> patches [N*Ho*Wo, 9*C] for a 3x3, pad=1 conv.
    N, H, W, C = x_nhwc.shape
    Ho = (H + 2 - 3) // stride + 1
    Wo = (W + 2 - 3) // stride + 1
    xp = jnp.pad(x_nhwc, ((0, 0), (1, 1), (1, 1), (0, 0)))
    cols = []
    for kh in range(3):
        for kw in range(3):
            cols.append(xp[:, kh:kh + (Ho - 1) * stride + 1:stride,
                              kw:kw + (Wo - 1) * stride + 1:stride, :])
    patches = jnp.concatenate(cols, axis=-1)  # [N, Ho, Wo, 9*C]
    return patches.reshape(N * Ho * Wo, 9 * C), (N, Ho, Wo)


def _fold_bn(gamma, beta, mean, var):
    scale = gamma / jnp.sqrt(var + EPS)
    bias = beta - mean * scale
    return scale, bias


def _flatten_conv_w(w_oihw, scale):
    # OIHW -> [kh*kw*in, out], with the folded-BN per-channel scale baked in.
    o, i, kh, kw = w_oihw.shape
    w = jnp.transpose(w_oihw, (2, 3, 1, 0)).reshape(kh * kw * i, o)
    return w * scale[None, :]


def init_resblock_params(key, in_c, out_c):
    ks = jax.random.split(key, 6)

    def bn_params(k):
        k1, k2, k3, k4 = jax.random.split(k, 4)
        return dict(
            gamma=jax.random.uniform(k1, (out_c,), jnp.float32, 0.5, 1.5),
            beta=0.1 * jax.random.normal(k2, (out_c,), jnp.float32),
            mean=0.1 * jax.random.normal(k3, (out_c,), jnp.float32),
            var=jax.random.uniform(k4, (out_c,), jnp.float32, 0.5, 1.5),
        )

    params = {
        "w1": 0.1 * jax.random.normal(ks[0], (out_c, in_c, 3, 3), jnp.float32),
        "bn1": bn_params(ks[1]),
        "w2": 0.1 * jax.random.normal(ks[2], (out_c, out_c, 3, 3), jnp.float32),
        "bn2": bn_params(ks[3]),
    }
    if in_c != out_c:
        params["wd"] = 0.1 * jax.random.normal(ks[4], (out_c, in_c, 1, 1), jnp.float32)
        params["bnd"] = bn_params(ks[5])
    return params


def resblock_forward(x_nchw, params, in_c, out_c, stride=1,
                     compute_dtype=jnp.bfloat16):
    N, _, H, W = x_nchw.shape
    x = jnp.transpose(x_nchw, (0, 2, 3, 1)).astype(compute_dtype)  # NHWC

    # --- conv1 (3x3, stride, pad=1) + BN1 + ReLU : fused Pallas kernel 1 ---
    patches1, (_, Ho, Wo) = _im2col3x3(x, stride)
    s1, b1 = _fold_bn(**params["bn1"])
    w1 = _flatten_conv_w(params["w1"], s1)
    y1 = _fused_matmul(patches1, w1, b1, relu=True,
                       out_dtype=compute_dtype, compute_dtype=compute_dtype)
    y1 = y1.reshape(N, Ho, Wo, out_c)

    # --- conv2 (3x3, stride=1, pad=1) + BN2 + shortcut : fused kernel 2 ---
    patches2, _ = _im2col3x3(y1, 1)
    s2, b2 = _fold_bn(**params["bn2"])
    w2 = _flatten_conv_w(params["w2"], s2)

    if in_c != out_c:
        # Projection shortcut: fold the 1x1 conv + BN into conv2's matmul by
        # concatenating the (strided) input channels onto the K axis.
        sd, bd = _fold_bn(**params["bnd"])
        wd = _flatten_conv_w(params["wd"], sd)
        res_in = x[:, ::stride, ::stride, :].reshape(N * Ho * Wo, in_c)
        patches_cat = jnp.concatenate(
            [patches2, res_in.astype(patches2.dtype)], axis=1)
        w_cat = jnp.concatenate([w2, wd], axis=0)
        out = _fused_matmul(patches_cat, w_cat, b2 + bd,
                            out_dtype=jnp.float32, compute_dtype=compute_dtype)
    else:
        # Identity shortcut (nn.Sequential()): add x directly in the kernel
        # epilogue (no eye-matmul).  As in PyTorch, in_c == out_c requires
        # stride == 1 for the residual shapes to line up.
        res_in = x.reshape(N * H * W, out_c)
        out = _fused_matmul(patches2, w2, b2, residual=res_in,
                            out_dtype=jnp.float32, compute_dtype=compute_dtype)

    out = out.reshape(N, Ho, Wo, out_c)
    return jnp.transpose(out, (0, 3, 1, 2))  # back to NCHW


# ---------------------------------------------------------------------------
# Pure-JAX references (NCHW)
# ---------------------------------------------------------------------------
def _conv_nchw(x, w, stride, pad, precision=None):
    return jax.lax.conv_general_dilated(
        x, w, (stride, stride), [(pad, pad), (pad, pad)],
        dimension_numbers=("NCHW", "OIHW", "NCHW"), precision=precision)


def resblock_reference(x_nchw, params, in_c, out_c, stride=1):
    """f32 reference mirroring the PyTorch forward (inference-form BN)."""
    def bn(x, bp):
        inv = bp["gamma"] / jnp.sqrt(bp["var"] + EPS)
        return (x * inv[None, :, None, None]
                + (bp["beta"] - bp["mean"] * inv)[None, :, None, None])

    out = jnp.maximum(bn(_conv_nchw(x_nchw, params["w1"], stride, 1), params["bn1"]), 0.0)
    out = bn(_conv_nchw(out, params["w2"], 1, 1), params["bn2"])
    if in_c != out_c:
        res = bn(_conv_nchw(x_nchw, params["wd"], stride, 0), params["bnd"])
    else:
        res = x_nchw
    return out + res


def resblock_reference_mirror(x_nchw, params, in_c, out_c, stride=1,
                              compute_dtype=jnp.bfloat16):
    """Reference applying the same low-precision casts as the Pallas path
    (bf16 matmul inputs / intermediate, f32 accumulate, folded BN) so the bf16
    kernel can be checked with a tight tolerance."""
    hi = jax.lax.Precision.HIGHEST

    def q(a):
        return a.astype(compute_dtype).astype(jnp.float32)

    xq = q(x_nchw.astype(jnp.float32))
    s1, b1 = _fold_bn(**params["bn1"])
    y1 = jnp.maximum(_conv_nchw(xq, q(params["w1"] * s1[:, None, None, None]),
                                stride, 1, hi) + b1[None, :, None, None], 0.0)
    y1 = q(y1)
    s2, b2 = _fold_bn(**params["bn2"])
    out = (_conv_nchw(y1, q(params["w2"] * s2[:, None, None, None]), 1, 1, hi)
           + b2[None, :, None, None])
    if in_c != out_c:
        sd, bd = _fold_bn(**params["bnd"])
        res = (_conv_nchw(xq, q(params["wd"] * sd[:, None, None, None]),
                          stride, 0, hi) + bd[None, :, None, None])
    else:
        res = xq
    return out + res


if __name__ == "__main__":
    key = jax.random.PRNGKey(0)
    kx, kp = jax.random.split(key)
    # (in_c, out_c, stride): projection shortcut, identity shortcut, strided
    configs = [(4, 8, 1), (8, 8, 1), (4, 8, 2)]
    for idx, (in_c, out_c, stride) in enumerate(configs):
        x = jax.random.normal(jax.random.fold_in(kx, idx), (2, in_c, 16, 16), jnp.float32)
        params = init_resblock_params(jax.random.fold_in(kp, idx), in_c, out_c)
        ref = resblock_reference(x, params, in_c, out_c, stride)

        # f32 compute path: must match the PyTorch-faithful reference tightly.
        out_f32 = jax.block_until_ready(
            resblock_forward(x, params, in_c, out_c, stride, compute_dtype=jnp.float32))
        assert out_f32.shape == ref.shape, (out_f32.shape, ref.shape)
        err_f32 = jnp.max(jnp.abs(out_f32 - ref))
        assert jnp.allclose(out_f32, ref, rtol=1e-4, atol=1e-4), f"f32 path max err {err_f32}"

        # bf16 compute path (the fast path): tight against a reference with the
        # same bf16 quantization points, loose against the pure-f32 reference
        # (difference is inherent bf16 input quantization, not kernel error).
        out_bf = jax.block_until_ready(
            resblock_forward(x, params, in_c, out_c, stride))
        ref_q = resblock_reference_mirror(x, params, in_c, out_c, stride, jnp.bfloat16)
        err_q = jnp.max(jnp.abs(out_bf - ref_q))
        assert jnp.allclose(out_bf, ref_q, rtol=1e-2, atol=1e-2), f"bf16 path max err {err_q}"
        err_l = jnp.max(jnp.abs(out_bf - ref))
        assert jnp.allclose(out_bf, ref, rtol=1e-1, atol=1.5e-1), f"bf16 vs f32 ref max err {err_l}"

    print("KERNEL_OK")
</pallas_src>

<mosaic_0001>
module attributes {stable_mosaic.version = 11 : i64} {
  func.func @kernel(%arg0: i32, %arg1: i32, %arg2: memref<512x128xf32, #tpu.memory_space<vmem>>, %arg3: memref<128x128xf32, #tpu.memory_space<vmem>>, %arg4: memref<1x128xf32, #tpu.memory_space<vmem>>, %arg5: memref<512x128xf32, #tpu.memory_space<vmem>>, %arg6: memref<512x128xf32, #tpu.memory_space<vmem>>) attributes {dimension_semantics = [#tpu.dimension_semantics<parallel>, #tpu.dimension_semantics<arbitrary>], iteration_bounds = array<i64: 1, 1>, scalar_prefetch = 0 : i64, scratch_operands = 1 : i64, tpu.core_type = #tpu.core_type<tc>, window_params = [{transform_indices = @transform_0, window_bounds = array<i64: 512, 128>}, {transform_indices = @transform_1, window_bounds = array<i64: 128, 128>}, {pipeline_mode = #tpu.pipeline_mode<synchronous>, transform_indices = @transform_2, window_bounds = array<i64: 1, 128>}, {transform_indices = @transform_3, window_bounds = array<i64: 512, 128>}]} {
    %c0_i32 = arith.constant 0 : i32
    %0 = arith.cmpi eq, %arg1, %c0_i32 : i32
    %1 = arith.extui %0 : i1 to i32
    %c0_i32_0 = arith.constant 0 : i32
    %2 = arith.cmpi ne, %1, %c0_i32_0 : i32
    scf.if %2 {
      %cst_10 = arith.constant 0.000000e+00 : f32
      %12 = vector.broadcast %cst_10 : f32 to vector<512x128xf32>
      %c0_11 = arith.constant 0 : index
      %c0_12 = arith.constant 0 : index
      %13 = vector.load %arg6[%c0_11, %c0_12] : memref<512x128xf32, #tpu.memory_space<vmem>>, vector<512x128xf32>
      tpu.vector_store %arg6[%c0_11, %c0_12], %12 {strides = array<i32>} : memref<512x128xf32, #tpu.memory_space<vmem>>, vector<512x128xf32>,
    } else {
    }
    %c0 = arith.constant 0 : index
    %c0_1 = arith.constant 0 : index
    %3 = vector.load %arg6[%c0, %c0_1] : memref<512x128xf32, #tpu.memory_space<vmem>>, vector<512x128xf32>
    %c0_2 = arith.constant 0 : index
    %c0_3 = arith.constant 0 : index
    %4 = vector.load %arg2[%c0_2, %c0_3] : memref<512x128xf32, #tpu.memory_space<vmem>>, vector<512x128xf32>
    %c0_4 = arith.constant 0 : index
    %c0_5 = arith.constant 0 : index
    %5 = vector.load %arg3[%c0_4, %c0_5] : memref<128x128xf32, #tpu.memory_space<vmem>>, vector<128x128xf32>
    %cst = arith.constant dense<0.000000e+00> : vector<512x128xf32>
    %6 = tpu.matmul %4, %5, %cst {dimension_numbers = #tpu.dot_dimension_numbers<[1], [0], [0], [1], [0, 0, 1, 1], [], []>} : vector<512x128xf32>, vector<128x128xf32>, vector<512x128xf32> -> vector<512x128xf32>
    %7 = arith.addf %3, %6 : vector<512x128xf32>
    %c0_6 = arith.constant 0 : index
    %c0_7 = arith.constant 0 : index
    %8 = vector.load %arg6[%c0_6, %c0_7] : memref<512x128xf32, #tpu.memory_space<vmem>>, vector<512x128xf32>
    tpu.vector_store %arg6[%c0_6, %c0_7], %7 {strides = array<i32>} : memref<512x128xf32, #tpu.memory_space<vmem>>, vector<512x128xf32>,
    %c0_i32_8 = arith.constant 0 : i32
    %9 = arith.cmpi eq, %arg1, %c0_i32_8 : i32
    %10 = arith.extui %9 : i1 to i32
    %c0_i32_9 = arith.constant 0 : i32
    %11 = arith.cmpi ne, %10, %c0_i32_9 : i32
    scf.if %11 {
      %c0_10 = arith.constant 0 : index
      %c0_11 = arith.constant 0 : index
      %12 = vector.load %arg6[%c0_10, %c0_11] : memref<512x128xf32, #tpu.memory_space<vmem>>, vector<512x128xf32>
      %c0_12 = arith.constant 0 : index
      %c0_13 = arith.constant 0 : index
      %13 = vector.load %arg4[%c0_12, %c0_13] : memref<1x128xf32, #tpu.memory_space<vmem>>, vector<1x128xf32>
      %14 = vector.broadcast %13 : vector<1x128xf32> to vector<512x128xf32>
      %15 = arith.addf %12, %14 : vector<512x128xf32>
      %cst_14 = arith.constant 0.000000e+00 : f32
      %16 = vector.broadcast %cst_14 : f32 to vector<512x128xf32>
      %17 = arith.maximumf %15, %16 : vector<512x128xf32>
      %c0_15 = arith.constant 0 : index
      %c0_16 = arith.constant 0 : index
      %18 = vector.load %arg5[%c0_15, %c0_16] : memref<512x128xf32, #tpu.memory_space<vmem>>, vector<512x128xf32>
      tpu.vector_store %arg5[%c0_15, %c0_16], %17 {strides = array<i32>} : memref<512x128xf32, #tpu.memory_space<vmem>>, vector<512x128xf32>,
    } else {
    }
    return
  }
  func.func @transform_0(%arg0: i32, %arg1: i32) -> (i32, i32) {
    %c0_i32 = arith.constant 0 : i32
    return %arg0, %arg1 : i32, i32
  }
  func.func @transform_1(%arg0: i32, %arg1: i32) -> (i32, i32) {
    %c0_i32 = arith.constant 0 : i32
    %c0_i32_0 = arith.constant 0 : i32
    return %arg1, %c0_i32 : i32, i32
  }
  func.func @transform_2(%arg0: i32, %arg1: i32) -> (i32, i32) {
    %c0_i32 = arith.constant 0 : i32
    %c0_i32_0 = arith.constant 0 : i32
    %c0_i32_1 = arith.constant 0 : i32
    return %c0_i32, %c0_i32_0 : i32, i32
  }
  func.func @transform_3(%arg0: i32, %arg1: i32) -> (i32, i32) {
    %c0_i32 = arith.constant 0 : i32
    %c0_i32_0 = arith.constant 0 : i32
    return %arg0, %c0_i32 : i32, i32
  }
}

</mosaic_0001>

<llo_original>
// kernel: tpu_custom_call.1
$region0: #{tpu_custom_call.1}
  #allocation0 [shape = 'u32[]', space=smem, size = 0x4, offset = 0x4, fixed_abs, tag = 'smem constant byte address 0x4 - core index']
  #allocation1 [shape = 'u32[144,128]{1,0:T(1,128)}', space=vmem, size = 0x12000, scoped, tag = 'internal scratch']
  #allocation2 [shape = 'f32[512,128]{1,0:T(8,128)}', space=vmem, size = 0x40000, scoped, tag = 'scratch operand']
  %s0 = inlined_call_operand.hbm [shape: f32[512,128], index: 0, kind: input, shape index: {}]
  %s1 = inlined_call_operand.hbm [shape: f32[128,128], index: 1, kind: input, shape index: {}]
  %s2 = inlined_call_operand.vmem [shape: f32[1,128], index: 2, kind: input, shape index: {}]
  %s3 = inlined_call_operand.hbm [shape: f32[512,128], index: 3, kind: output, shape index: {}]
  %s4 = sld [smem:[#allocation0]]
  $region38: #{tpu_custom_call.1} parent=0
    _
  %s6 = ssub.s32 1, %s4
  %s7 = scalar_select 0, %s6, %s4
  $region1: #{tpu_custom_call.1} parent=0
    #allocation3 [shape = 'u8[262144]{0}', space=vmem, size = 0x40000, scoped, tag = 'input window, operand 0, single buffered']
    #allocation4 [shape = 's32[1]{0}', space=sflag, size = 0x4, scoped, tag = 'scoped memory for tpu_custom_call.1']
    #allocation5 [shape = 's32[1]{0}', space=sflag, size = 0x4, scoped, tag = 'scoped memory for tpu_custom_call.1']
    #allocation6 [shape = 'u8[65536]{0}', space=vmem, size = 0x10000, scoped, tag = 'input window, operand 1, single buffered']
    #allocation7 [shape = 's32[1]{0}', space=sflag, size = 0x4, scoped, tag = 'scoped memory for tpu_custom_call.1']
    #allocation8 [shape = 'u8[262144]{0}', space=vmem, size = 0x40000, scoped, tag = 'output window, operand 0, single buffered']
    %8 = vsyncpa [#allocation4], 0
    %9 = vsyncpa [#allocation7], 0
    %10 = vsyncpa [#allocation5], 0
    // Predicated region
    $region2: #{tpu_custom_call.1} parent=1 // pred_check
      _
    $region3: #{tpu_custom_call.1} parent=1 // pred_check_branch
      %12 = sbr.rel (0) target = $region5
    $region4: #{tpu_custom_call.1} parent=1 // pred_region
      %s14 = ssub.s32 8192, 8192
      %15 = vsyncadd [#allocation4], %s14
      %s16 = sshll.u32 [#allocation3], 4
      %s17 = int_to_ptr.vmem [resolvable:$true] %s16
      %22 = dma.hbm_to_vmem [thread:$0]  %s0, 8192, %s17, [#allocation4], 128, 128, 8
    $region5: #{tpu_custom_call.1} parent=1 // pred_fallthru
      _
    // Predicated region
    $region6: #{tpu_custom_call.1} parent=1 // pred_check
      _
    $region7: #{tpu_custom_call.1} parent=1 // pred_check_branch
      %24 = sbr.rel (0) target = $region9
    $region8: #{tpu_custom_call.1} parent=1 // pred_region
      %s26 = ssub.s32 2048, 2048
      %27 = vsyncadd [#allocation7], %s26
      %s28 = sshll.u32 [#allocation6], 4
      %s29 = int_to_ptr.vmem [resolvable:$true] %s28
      %34 = dma.hbm_to_vmem [thread:$0]  %s1, 2048, %s29, [#allocation7], 128, 128, 8
    $region9: #{tpu_custom_call.1} parent=1 // pred_fallthru
      _
    // Predicated region
    $region10: #{tpu_custom_call.1} parent=1 // pred_check
      _
    $region11: #{tpu_custom_call.1} parent=1 // pred_check_branch
      %36 = sbr.rel (0) target = $region13
    $region12: #{tpu_custom_call.1} parent=1 // pred_region
      _
    $region13: #{tpu_custom_call.1} parent=1 // pred_fallthru
      _
    // Predicated region
    $region14: #{tpu_custom_call.1} parent=1 // pred_check
      _
    $region15: #{tpu_custom_call.1} parent=1 // pred_check_branch
      %38 = sbr.rel (0) target = $region17
    $region16: #{tpu_custom_call.1} parent=1 // pred_region
      %39 = dma.done [#allocation4], 8192
    $region17: #{tpu_custom_call.1} parent=1 // pred_fallthru
      _
    // Predicated region
    $region18: #{tpu_custom_call.1} parent=1 // pred_check
      _
    $region19: #{tpu_custom_call.1} parent=1 // pred_check_branch
      %41 = sbr.rel (0) target = $region21
    $region20: #{tpu_custom_call.1} parent=1 // pred_region
      %42 = dma.done [#allocation7], 2048
    $region21: #{tpu_custom_call.1} parent=1 // pred_fallthru
      _
    %p43 = scmp.eq.s32.totalorder 0, 0
    // Predicated region
    $region22: #{tpu_custom_call.1} parent=1 // pred_check
      %p44 = pneg %p43
    $region23: #{tpu_custom_call.1} parent=1 // pred_check_branch
      %46 = sbr.rel (%p44) target = $region25
    $region24: #{tpu_custom_call.1} parent=1 // pred_region
      %47 = vst [vmem:[#allocation2] sm:$0xff] 0.0
      %48 = vst [vmem:[#allocation2 + $0x8] sm:$0xff] 0.0
      %49 = vst [vmem:[#allocation2 + $0x10] sm:$0xff] 0.0
      %50 = vst [vmem:[#allocation2 + $0x18] sm:$0xff] 0.0
      %51 = vst [vmem:[#allocation2 + $0x20] sm:$0xff] 0.0
      %52 = vst [vmem:[#allocation2 + $0x28] sm:$0xff] 0.0
      %53 = vst [vmem:[#allocation2 + $0x30] sm:$0xff] 0.0
      %54 = vst [vmem:[#allocation2 + $0x38] sm:$0xff] 0.0
      %55 = vst [vmem:[#allocation2 + $0x40] sm:$0xff] 0.0
      %56 = vst [vmem:[#allocation2 + $0x48] sm:$0xff] 0.0
      %57 = vst [vmem:[#allocation2 + $0x50] sm:$0xff] 0.0
      %58 = vst [vmem:[#allocation2 + $0x58] sm:$0xff] 0.0
      %59 = vst [vmem:[#allocation2 + $0x60] sm:$0xff] 0.0
      %60 = vst [vmem:[#allocation2 + $0x68] sm:$0xff] 0.0
      %61 = vst [vmem:[#allocation2 + $0x70] sm:$0xff] 0.0
      %62 = vst [vmem:[#allocation2 + $0x78] sm:$0xff] 0.0
      %63 = vst [vmem:[#allocation2 + $0x80] sm:$0xff] 0.0
      %64 = vst [vmem:[#allocation2 + $0x88] sm:$0xff] 0.0
      %65 = vst [vmem:[#allocation2 + $0x90] sm:$0xff] 0.0
      %66 = vst [vmem:[#allocation2 + $0x98] sm:$0xff] 0.0
      %67 = vst [vmem:[#allocation2 + $0xa0] sm:$0xff] 0.0
      %68 = vst [vmem:[#allocation2 + $0xa8] sm:$0xff] 0.0
      %69 = vst [vmem:[#allocation2 + $0xb0] sm:$0xff] 0.0
      %70 = vst [vmem:[#allocation2 + $0xb8] sm:$0xff] 0.0
      %71 = vst [vmem:[#allocation2 + $0xc0] sm:$0xff] 0.0
      %72 = vst [vmem:[#allocation2 + $0xc8] sm:$0xff] 0.0
      %73 = vst [vmem:[#allocation2 + $0xd0] sm:$0xff] 0.0
      %74 = vst [vmem:[#allocation2 + $0xd8] sm:$0xff] 0.0
      %75 = vst [vmem:[#allocation2 + $0xe0] sm:$0xff] 0.0
      %76 = vst [vmem:[#allocation2 + $0xe8] sm:$0xff] 0.0
      %77 = vst [vmem:[#allocation2 + $0xf0] sm:$0xff] 0.0
      %78 = vst [vmem:[#allocation2 + $0xf8] sm:$0xff] 0.0
      %79 = vst [vmem:[#allocation2 + $0x100] sm:$0xff] 0.0
      %80 = vst [vmem:[#allocation2 + $0x108] sm:$0xff] 0.0
      %81 = vst [vmem:[#allocation2 + $0x110] sm:$0xff] 0.0
      %82 = vst [vmem:[#allocation2 + $0x118] sm:$0xff] 0.0
      %83 = vst [vmem:[#allocation2 + $0x120] sm:$0xff] 0.0
      %84 = vst [vmem:[#allocation2 + $0x128] sm:$0xff] 0.0
      %85 = vst [vmem:[#allocation2 + $0x130] sm:$0xff] 0.0
      %86 = vst [vmem:[#allocation2 + $0x138] sm:$0xff] 0.0
      %87 = vst [vmem:[#allocation2 + $0x140] sm:$0xff] 0.0
      %88 = vst [vmem:[#allocation2 + $0x148] sm:$0xff] 0.0
      %89 = vst [vmem:[#allocation2 + $0x150] sm:$0xff] 0.0
      %90 = vst [vmem:[#allocation2 + $0x158] sm:$0xff] 0.0
      %91 = vst [vmem:[#allocation2 + $0x160] sm:$0xff] 0.0
      %92 = vst [vmem:[#allocation2 + $0x168] sm:$0xff] 0.0
      %93 = vst [vmem:[#allocation2 + $0x170] sm:$0xff] 0.0
      %94 = vst [vmem:[#allocation2 + $0x178] sm:$0xff] 0.0
      %95 = vst [vmem:[#allocation2 + $0x180] sm:$0xff] 0.0
      %96 = vst [vmem:[#allocation2 + $0x188] sm:$0xff] 0.0
      %97 = vst [vmem:[#allocation2 + $0x190] sm:$0xff] 0.0
      %98 = vst [vmem:[#allocation2 + $0x198] sm:$0xff] 0.0
      %99 = vst [vmem:[#allocation2 + $0x1a0] sm:$0xff] 0.0
      %100 = vst [vmem:[#allocation2 + $0x1a8] sm:$0xff] 0.0
      %101 = vst [vmem:[#allocation2 + $0x1b0] sm:$0xff] 0.0
      %102 = vst [vmem:[#allocation2 + $0x1b8] sm:$0xff] 0.0
      %103 = vst [vmem:[#allocation2 + $0x1c0] sm:$0xff] 0.0
      %104 = vst [vmem:[#allocation2 + $0x1c8] sm:$0xff] 0.0
      %105 = vst [vmem:[#allocation2 + $0x1d0] sm:$0xff] 0.0
      %106 = vst [vmem:[#allocation2 + $0x1d8] sm:$0xff] 0.0
      %107 = vst [vmem:[#allocation2 + $0x1e0] sm:$0xff] 0.0
      %108 = vst [vmem:[#allocation2 + $0x1e8] sm:$0xff] 0.0
      %109 = vst [vmem:[#allocation2 + $0x1f0] sm:$0xff] 0.0
      %110 = vst [vmem:[#allocation2 + $0x1f8] sm:$0xff] 0.0
    $region25: #{tpu_custom_call.1} parent=1 // pred_fallthru
      _
    %v111 = vld [vmem:[#allocation2] sm:$0xff]
    %v112 = vld [vmem:[#allocation2 + $0x8] sm:$0xff]
    %v113 = vld [vmem:[#allocation2 + $0x10] sm:$0xff]
    %v114 = vld [vmem:[#allocation2 + $0x18] sm:$0xff]
    %v115 = vld [vmem:[#allocation2 + $0x20] sm:$0xff]
    %v116 = vld [vmem:[#allocation2 + $0x28] sm:$0xff]
    %v117 = vld [vmem:[#allocation2 + $0x30] sm:$0xff]
    %v118 = vld [vmem:[#allocation2 + $0x38] sm:$0xff]
    %v119 = vld [vmem:[#allocation2 + $0x40] sm:$0xff]
    %v120 = vld [vmem:[#allocation2 + $0x48] sm:$0xff]
    %v121 = vld [vmem:[#allocation2 + $0x50] sm:$0xff]
    %v122 = vld [vmem:[#allocation2 + $0x58] sm:$0xff]
    %v123 = vld [vmem:[#allocation2 + $0x60] sm:$0xff]
    %v124 = vld [vmem:[#allocation2 + $0x68] sm:$0xff]
    %v125 = vld [vmem:[#allocation2 + $0x70] sm:$0xff]
    %v126 = vld [vmem:[#allocation2 + $0x78] sm:$0xff]
    %v127 = vld [vmem:[#allocation2 + $0x80] sm:$0xff]
    %v128 = vld [vmem:[#allocation2 + $0x88] sm:$0xff]
    %v129 = vld [vmem:[#allocation2 + $0x90] sm:$0xff]
    %v130 = vld [vmem:[#allocation2 + $0x98] sm:$0xff]
    %v131 = vld [vmem:[#allocation2 + $0xa0] sm:$0xff]
    %v132 = vld [vmem:[#allocation2 + $0xa8] sm:$0xff]
    %v133 = vld [vmem:[#allocation2 + $0xb0] sm:$0xff]
    %v134 = vld [vmem:[#allocation2 + $0xb8] sm:$0xff]
    %v135 = vld [vmem:[#allocation2 + $0xc0] sm:$0xff]
    %v136 = vld [vmem:[#allocation2 + $0xc8] sm:$0xff]
    %v137 = vld [vmem:[#allocation2 + $0xd0] sm:$0xff]
    %v138 = vld [vmem:[#allocation2 + $0xd8] sm:$0xff]
    %v139 = vld [vmem:[#allocation2 + $0xe0] sm:$0xff]
    %v140 = vld [vmem:[#allocation2 + $0xe8] sm:$0xff]
    %v141 = vld [vmem:[#allocation2 + $0xf0] sm:$0xff]
    %v142 = vld [vmem:[#allocation2 + $0xf8] sm:$0xff]
    %v143 = vld [vmem:[#allocation2 + $0x100] sm:$0xff]
    %v144 = vld [vmem:[#allocation2 + $0x108] sm:$0xff]
    %v145 = vld [vmem:[#allocation2 + $0x110] sm:$0xff]
    %v146 = vld [vmem:[#allocation2 + $0x118] sm:$0xff]
    %v147 = vld [vmem:[#allocation2 + $0x120] sm:$0xff]
    %v148 = vld [vmem:[#allocation2 + $0x128] sm:$0xff]
    %v149 = vld [vmem:[#allocation2 + $0x130] sm:$0xff]
    %v150 = vld [vmem:[#allocation2 + $0x138] sm:$0xff]
    %v151 = vld [vmem:[#allocation2 + $0x140] sm:$0xff]
    %v152 = vld [vmem:[#allocation2 + $0x148] sm:$0xff]
    %v153 = vld [vmem:[#allocation2 + $0x150] sm:$0xff]
    %v154 = vld [vmem:[#allocation2 + $0x158] sm:$0xff]
    %v155 = vld [vmem:[#allocation2 + $0x160] sm:$0xff]
    %v156 = vld [vmem:[#allocation2 + $0x168] sm:$0xff]
    %v157 = vld [vmem:[#allocation2 + $0x170] sm:$0xff]
    %v158 = vld [vmem:[#allocation2 + $0x178] sm:$0xff]
    %v159 = vld [vmem:[#allocation2 + $0x180] sm:$0xff]
    %v160 = vld [vmem:[#allocation2 + $0x188] sm:$0xff]
    %v161 = vld [vmem:[#allocation2 + $0x190] sm:$0xff]
    %v162 = vld [vmem:[#allocation2 + $0x198] sm:$0xff]
    %v163 = vld [vmem:[#allocation2 + $0x1a0] sm:$0xff]
    %v164 = vld [vmem:[#allocation2 + $0x1a8] sm:$0xff]
    %v165 = vld [vmem:[#allocation2 + $0x1b0] sm:$0xff]
    %v166 = vld [vmem:[#allocation2 + $0x1b8] sm:$0xff]
    %v167 = vld [vmem:[#allocation2 + $0x1c0] sm:$0xff]
    %v168 = vld [vmem:[#allocation2 + $0x1c8] sm:$0xff]
    %v169 = vld [vmem:[#allocation2 + $0x1d0] sm:$0xff]
    %v170 = vld [vmem:[#allocation2 + $0x1d8] sm:$0xff]
    %v171 = vld [vmem:[#allocation2 + $0x1e0] sm:$0xff]
    %v172 = vld [vmem:[#allocation2 + $0x1e8] sm:$0xff]
    %v173 = vld [vmem:[#allocation2 + $0x1f0] sm:$0xff]
    %v174 = vld [vmem:[#allocation2 + $0x1f8] sm:$0xff]
    %v175 = vld [vmem:[#allocation3] sm:$0xff]
    %v176 = vld [vmem:[#allocation3 + $0x8] sm:$0xff]
    %v177 = vld [vmem:[#allocation3 + $0x10] sm:$0xff]
    %v178 = vld [vmem:[#allocation3 + $0x18] sm:$0xff]
    %v179 = vld [vmem:[#allocation3 + $0x20] sm:$0xff]
    %v180 = vld [vmem:[#allocation3 + $0x28] sm:$0xff]
    %v181 = vld [vmem:[#allocation3 + $0x30] sm:$0xff]
    %v182 = vld [vmem:[#allocation3 + $0x38] sm:$0xff]
    %v183 = vld [vmem:[#allocation3 + $0x40] sm:$0xff]
    %v184 = vld [vmem:[#allocation3 + $0x48] sm:$0xff]
    %v185 = vld [vmem:[#allocation3 + $0x50] sm:$0xff]
    %v186 = vld [vmem:[#allocation3 + $0x58] sm:$0xff]
    %v187 = vld [vmem:[#allocation3 + $0x60] sm:$0xff]
    %v188 = vld [vmem:[#allocation3 + $0x68] sm:$0xff]
    %v189 = vld [vmem:[#allocation3 + $0x70] sm:$0xff]
    %v190 = vld [vmem:[#allocation3 + $0x78] sm:$0xff]
    %v191 = vld [vmem:[#allocation3 + $0x80] sm:$0xff]
    %v192 = vld [vmem:[#allocation3 + $0x88] sm:$0xff]
    %v193 = vld [vmem:[#allocation3 + $0x90] sm:$0xff]
    %v194 = vld [vmem:[#allocation3 + $0x98] sm:$0xff]
    %v195 = vld [vmem:[#allocation3 + $0xa0] sm:$0xff]
    %v196 = vld [vmem:[#allocation3 + $0xa8] sm:$0xff]
    %v197 = vld [vmem:[#allocation3 + $0xb0] sm:$0xff]
    %v198 = vld [vmem:[#allocation3 + $0xb8] sm:$0xff]
    %v199 = vld [vmem:[#allocation3 + $0xc0] sm:$0xff]
    %v200 = vld [vmem:[#allocation3 + $0xc8] sm:$0xff]
    %v201 = vld [vmem:[#allocation3 + $0xd0] sm:$0xff]
    %v202 = vld [vmem:[#allocation3 + $0xd8] sm:$0xff]
    %v203 = vld [vmem:[#allocation3 + $0xe0] sm:$0xff]
    %v204 = vld [vmem:[#allocation3 + $0xe8] sm:$0xff]
    %v205 = vld [vmem:[#allocation3 + $0xf0] sm:$0xff]
    %v206 = vld [vmem:[#allocation3 + $0xf8] sm:$0xff]
    %v207 = vld [vmem:[#allocation3 + $0x100] sm:$0xff]
    %v208 = vld [vmem:[#allocation3 + $0x108] sm:$0xff]
    %v209 = vld [vmem:[#allocation3 + $0x110] sm:$0xff]
    %v210 = vld [vmem:[#allocation3 + $0x118] sm:$0xff]
    %v211 = vld [vmem:[#allocation3 + $0x120] sm:$0xff]
    %v212 = vld [vmem:[#allocation3 + $0x128] sm:$0xff]
    %v213 = vld [vmem:[#allocation3 + $0x130] sm:$0xff]
    %v214 = vld [vmem:[#allocation3 + $0x138] sm:$0xff]
    %v215 = vld [vmem:[#allocation3 + $0x140] sm:$0xff]
    %v216 = vld [vmem:[#allocation3 + $0x148] sm:$0xff]
    %v217 = vld [vmem:[#allocation3 + $0x150] sm:$0xff]
    %v218 = vld [vmem:[#allocation3 + $0x158] sm:$0xff]
    %v219 = vld [vmem:[#allocation3 + $0x160] sm:$0xff]
    %v220 = vld [vmem:[#allocation3 + $0x168] sm:$0xff]
    %v221 = vld [vmem:[#allocation3 + $0x170] sm:$0xff]
    %v222 = vld [vmem:[#allocation3 + $0x178] sm:$0xff]
    %v223 = vld [vmem:[#allocation3 + $0x180] sm:$0xff]
    %v224 = vld [vmem:[#allocation3 + $0x188] sm:$0xff]
    %v225 = vld [vmem:[#allocation3 + $0x190] sm:$0xff]
    %v226 = vld [vmem:[#allocation3 + $0x198] sm:$0xff]
    %v227 = vld [vmem:[#allocation3 + $0x1a0] sm:$0xff]
    %v228 = vld [vmem:[#allocation3 + $0x1a8] sm:$0xff]
    %v229 = vld [vmem:[#allocation3 + $0x1b0] sm:$0xff]
    %v230 = vld [vmem:[#allocation3 + $0x1b8] sm:$0xff]
    %v231 = vld [vmem:[#allocation3 + $0x1c0] sm:$0xff]
    %v232 = vld [vmem:[#allocation3 + $0x1c8] sm:$0xff]
    %v233 = vld [vmem:[#allocation3 + $0x1d0] sm:$0xff]
    %v234 = vld [vmem:[#allocation3 + $0x1d8] sm:$0xff]
    %v235 = vld [vmem:[#allocation3 + $0x1e0] sm:$0xff]
    %v236 = vld [vmem:[#allocation3 + $0x1e8] sm:$0xff]
    %v237 = vld [vmem:[#allocation3 + $0x1f0] sm:$0xff]
    %v238 = vld [vmem:[#allocation3 + $0x1f8] sm:$0xff]
    %v239 = vld [vmem:[#allocation6] sm:$0xff]
    %v240 = vld [vmem:[#allocation6 + $0x8] sm:$0xff]
    %v241 = vld [vmem:[#allocation6 + $0x10] sm:$0xff]
    %v242 = vld [vmem:[#allocation6 + $0x18] sm:$0xff]
    %v243 = vld [vmem:[#allocation6 + $0x20] sm:$0xff]
    %v244 = vld [vmem:[#allocation6 + $0x28] sm:$0xff]
    %v245 = vld [vmem:[#allocation6 + $0x30] sm:$0xff]
    %v246 = vld [vmem:[#allocation6 + $0x38] sm:$0xff]
    %v247 = vld [vmem:[#allocation6 + $0x40] sm:$0xff]
    %v248 = vld [vmem:[#allocation6 + $0x48] sm:$0xff]
    %v249 = vld [vmem:[#allocation6 + $0x50] sm:$0xff]
    %v250 = vld [vmem:[#allocation6 + $0x58] sm:$0xff]
    %v251 = vld [vmem:[#allocation6 + $0x60] sm:$0xff]
    %v252 = vld [vmem:[#allocation6 + $0x68] sm:$0xff]
    %v253 = vld [vmem:[#allocation6 + $0x70] sm:$0xff]
    %v254 = vld [vmem:[#allocation6 + $0x78] sm:$0xff]
    %255 = vmatprep.subr.mxu0 0.0
    %256 = vmatpush1.msra.mxu0 %v239
    %257 = vmatprep.subr.mxu0 0.0
    %258 = vmatpush1.msra.mxu0 %v240
    %259 = vmatprep.subr.mxu0 0.0
    %260 = vmatpush1.msra.mxu0 %v241
    %261 = vmatprep.subr.mxu0 0.0
    %262 = vmatpush1.msra.mxu0 %v242
    %263 = vmatprep.subr.mxu0 0.0
    %264 = vmatpush1.msra.mxu0 %v243
    %265 = vmatprep.subr.mxu0 0.0
    %266 = vmatpush1.msra.mxu0 %v244
    %267 = vmatprep.subr.mxu0 0.0
    %268 = vmatpush1.msra.mxu0 %v245
    %269 = vmatprep.subr.mxu0 0.0
    %270 = vmatpush1.msra.mxu0 %v246
    %271 = vmatprep.subr.mxu0 0.0
    %272 = vmatpush1.msra.mxu0 %v247
    %273 = vmatprep.subr.mxu0 0.0
    %274 = vmatpush1.msra.mxu0 %v248
    %275 = vmatprep.subr.mxu0 0.0
    %276 = vmatpush1.msra.mxu0 %v249
    %277 = vmatprep.subr.mxu0 0.0
    %278 = vmatpush1.msra.mxu0 %v250
    %279 = vmatprep.subr.mxu0 0.0
    %280 = vmatpush1.msra.mxu0 %v251
    %281 = vmatprep.subr.mxu0 0.0
    %282 = vmatpush1.msra.mxu0 %v252
    %283 = vmatprep.subr.mxu0 0.0
    %284 = vmatpush1.msra.mxu0 %v253
    %285 = vmatprep.subr.mxu0 0.0
    %286 = vmatpush1.msra.mxu0 %v254
    %287 = vmatprep.subr.mxu0 0.0
    %288 = vmatpush1.msra.mxu0 0.0
    %289 = vmatprep.subr.mxu0 0.0
    %290 = vmatpush1.msra.mxu0 0.0
    %291 = vmatprep.subr.mxu0 0.0
    %292 = vmatpush1.msra.mxu0 0.0
    %293 = vmatprep.subr.mxu0 0.0
    %294 = vmatpush1.msra.mxu0 0.0
    %295 = vmatprep.subr.mxu0 0.0
    %296 = vmatpush1.msra.mxu0 0.0
    %297 = vmatprep.subr.mxu0 0.0
    %298 = vmatpush1.msra.mxu0 0.0
    %299 = vmatprep.subr.mxu0 0.0
    %300 = vmatpush1.msra.mxu0 0.0
    %301 = vmatprep.subr.mxu0 0.0
    %302 = vmatpush1.msra.mxu0 0.0
    %303 = vmatprep.subr.mxu0 0.0
    %304 = vmatpush1.msra.mxu0 0.0
    %305 = vmatprep.subr.mxu0 0.0
    %306 = vmatpush1.msra.mxu0 0.0
    %307 = vmatprep.subr.mxu0 0.0
    %308 = vmatpush1.msra.mxu0 0.0
    %309 = vmatprep.subr.mxu0 0.0
    %310 = vmatpush1.msra.mxu0 0.0
    %311 = vmatprep.subr.mxu0 0.0
    %312 = vmatpush1.msra.mxu0 0.0
    %313 = vmatprep.subr.mxu0 0.0
    %314 = vmatpush1.msra.mxu0 0.0
    %315 = vmatprep.subr.mxu0 0.0
    %316 = vmatpush1.msra.mxu0 0.0
    %317 = vmatprep.subr.mxu0 0.0
    %318 = vmatpush1.msra.mxu0 0.0
    %319 = vmatprep.mubr.f32.mxu0 0.0
    %320 = vmatmul.mubr.f32.gmra.mrb[0].mxu0 %v175
    %v321 = vpop.f32.mrb[0].mxu0
    %v322 = vadd.f32 0.0, %v321
    %v323 = vpop.f32.mrb[0].mxu0
    %324 = vmatprep.mubr.f32.mxu0 0.0
    %325 = vmatmul.mubr.f32.gmra.mrb[0].mxu0 %v176
    %v326 = vpop.f32.mrb[0].mxu0
    %v327 = vadd.f32 0.0, %v326
    %v328 = vpop.f32.mrb[0].mxu0
    %329 = vmatprep.mubr.f32.mxu0 0.0
    %330 = vmatmul.mubr.f32.gmra.mrb[0].mxu0 %v177
    %v331 = vpop.f32.mrb[0].mxu0
    %v332 = vadd.f32 0.0, %v331
    %v333 = vpop.f32.mrb[0].mxu0
    %334 = vmatprep.mubr.f32.mxu0 0.0
    %335 = vmatmul.mubr.f32.gmra.mrb[0].mxu0 %v178
    %v336 = vpop.f32.mrb[0].mxu0
    %v337 = vadd.f32 0.0, %v336
    %v338 = vpop.f32.mrb[0].mxu0
    %339 = vmatprep.mubr.f32.mxu0 0.0
    %340 = vmatmul.mubr.f32.gmra.mrb[0].mxu0 %v179
    %v341 = vpop.f32.mrb[0].mxu0
    %v342 = vadd.f32 0.0, %v341
    %v343 = vpop.f32.mrb[0].mxu0
    %344 = vmatprep.mubr.f32.mxu0 0.0
    %345 = vmatmul.mubr.f32.gmra.mrb[0].mxu0 %v180
    %v346 = vpop.f32.mrb[0].mxu0
    %v347 = vadd.f32 0.0, %v346
    %v348 = vpop.f32.mrb[0].mxu0
    %349 = vmatprep.mubr.f32.mxu0 0.0
    %350 = vmatmul.mubr.f32.gmra.mrb[0].mxu0 %v181
    %v351 = vpop.f32.mrb[0].mxu0
    %v352 = vadd.f32 0.0, %v351
    %v353 = vpop.f32.mrb[0].mxu0
    %354 = vmatprep.mubr.f32.mxu0 0.0
    %355 = vmatmul.mubr.f32.gmra.mrb[0].mxu0 %v182
    %v356 = vpop.f32.mrb[0].mxu0
    %v357 = vadd.f32 0.0, %v356
    %v358 = vpop.f32.mrb[0].mxu0
    %359 = vmatprep.mubr.f32.mxu0 0.0
    %360 = vmatmul.mubr.f32.gmra.mrb[0].mxu0 %v183
    %v361 = vpop.f32.mrb[0].mxu0
    %v362 = vadd.f32 0.0, %v361
    %v363 = vpop.f32.mrb[0].mxu0
    %364 = vmatprep.mubr.f32.mxu0 0.0
    %365 = vmatmul.mubr.f32.gmra.mrb[0].mxu0 %v184
    %v366 = vpop.f32.mrb[0].mxu0
    %v367 = vadd.f32 0.0, %v366
    %v368 = vpop.f32.mrb[0].mxu0
    %369 = vmatprep.mubr.f32.mxu0 0.0
    %370 = vmatmul.mubr.f32.gmra.mrb[0].mxu0 %v185
    %v371 = vpop.f32.mrb[0].mxu0
    %v372 = vadd.f32 0.0, %v371
    %v373 = vpop.f32.mrb[0].mxu0
    %374 = vmatprep.mubr.f32.mxu0 0.0
    %375 = vmatmul.mubr.f32.gmra.mrb[0].mxu0 %v186
    %v376 = vpop.f32.mrb[0].mxu0
    %v377 = vadd.f32 0.0, %v376
    %v378 = vpop.f32.mrb[0].mxu0
    %379 = vmatprep.mubr.f32.mxu0 0.0
    %380 = vmatmul.mubr.f32.gmra.mrb[0].mxu0 %v187
    %v381 = vpop.f32.mrb[0].mxu0
    %v382 = vadd.f32 0.0, %v381
    %v383 = vpop.f32.mrb[0].mxu0
    %384 = vmatprep.mubr.f32.mxu0 0.0
    %385 = vmatmul.mubr.f32.gmra.mrb[0].mxu0 %v188
    %v386 = vpop.f32.mrb[0].mxu0
    %v387 = vadd.f32 0.0, %v386
    %v388 = vpop.f32.mrb[0].mxu0
    %389 = vmatprep.mubr.f32.mxu0 0.0
    %390 = vmatmul.mubr.f32.gmra.mrb[0].mxu0 %v189
    %v391 = vpop.f32.mrb[0].mxu0
    %v392 = vadd.f32 0.0, %v391
    %v393 = vpop.f32.mrb[0].mxu0
    %394 = vmatprep.mubr.f32.mxu0 0.0
    %395 = vmatmul.mubr.f32.gmra.mrb[0].mxu0 %v190
    %v396 = vpop.f32.mrb[0].mxu0
    %v397 = vadd.f32 0.0, %v396
    %v398 = vpop.f32.mrb[0].mxu0
    %399 = vmatprep.mubr.f32.mxu0 0.0
    %400 = vmatmul.mubr.f32.gmra.mrb[0].mxu0 %v191
    %v401 = vpop.f32.mrb[0].mxu0
    %v402 = vadd.f32 0.0, %v401
    %v403 = vpop.f32.mrb[0].mxu0
    %404 = vmatprep.mubr.f32.mxu0 0.0
    %405 = vmatmul.mubr.f32.gmra.mrb[0].mxu0 %v192
    %v406 = vpop.f32.mrb[0].mxu0
    %v407 = vadd.f32 0.0, %v406
    %v408 = vpop.f32.mrb[0].mxu0
    %409 = vmatprep.mubr.f32.mxu0 0.0
    %410 = vmatmul.mubr.f32.gmra.mrb[0].mxu0 %v193
    %v411 = vpop.f32.mrb[0].mxu0
    %v412 = vadd.f32 0.0, %v411
    %v413 = vpop.f32.mrb[0].mxu0
    %414 = vmatprep.mubr.f32.mxu0 0.0
    %415 = vmatmul.mubr.f32.gmra.mrb[0].mxu0 %v194
    %v416 = vpop.f32.mrb[0].mxu0
    %v417 = vadd.f32 0.0, %v416
    %v418 = vpop.f32.mrb[0].mxu0
    %419 = vmatprep.mubr.f32.mxu0 0.0
    %420 = vmatmul.mubr.f32.gmra.mrb[0].mxu0 %v195
    %v421 = vpop.f32.mrb[0].mxu0
    %v422 = vadd.f32 0.0, %v421
    %v423 = vpop.f32.mrb[0].mxu0
    %424 = vmatprep.mubr.f32.mxu0 0.0
    %425 = vmatmul.mubr.f32.gmra.mrb[0].mxu0 %v196
    %v426 = vpop.f32.mrb[0].mxu0
    %v427 = vadd.f32 0.0, %v426
    %v428 = vpop.f32.mrb[0].mxu0
    %429 = vmatprep.mubr.f32.mxu0 0.0
    %430 = vmatmul.mubr.f32.gmra.mrb[0].mxu0 %v197
    %v431 = vpop.f32.mrb[0].mxu0
    %v432 = vadd.f32 0.0, %v431
    %v433 = vpop.f32.mrb[0].mxu0
    %434 = vmatprep.mubr.f32.mxu0 0.0
    %435 = vmatmul.mubr.f32.gmra.mrb[0].mxu0 %v198
    %v436 = vpop.f32.mrb[0].mxu0
    %v437 = vadd.f32 0.0, %v436
    %v438 = vpop.f32.mrb[0].mxu0
    %439 = vmatprep.mubr.f32.mxu0 0.0
    %440 = vmatmul.mubr.f32.gmra.mrb[0].mxu0 %v199
    %v441 = vpop.f32.mrb[0].mxu0
    %v442 = vadd.f32 0.0, %v441
    %v443 = vpop.f32.mrb[0].mxu0
    %444 = vmatprep.mubr.f32.mxu0 0.0
    %445 = vmatmul.mubr.f32.gmra.mrb[0].mxu0 %v200
    %v446 = vpop.f32.mrb[0].mxu0
    %v447 = vadd.f32 0.0, %v446
    %v448 = vpop.f32.mrb[0].mxu0
    %449 = vmatprep.mubr.f32.mxu0 0.0
    %450 = vmatmul.mubr.f32.gmra.mrb[0].mxu0 %v201
    %v451 = vpop.f32.mrb[0].mxu0
    %v452 = vadd.f32 0.0, %v451
    %v453 = vpop.f32.mrb[0].mxu0
    %454 = vmatprep.mubr.f32.mxu0 0.0
    %455 = vmatmul.mubr.f32.gmra.mrb[0].mxu0 %v202
    %v456 = vpop.f32.mrb[0].mxu0
    %v457 = vadd.f32 0.0, %v456
    %v458 = vpop.f32.mrb[0].mxu0
    %459 = vmatprep.mubr.f32.mxu0 0.0
    %460 = vmatmul.mubr.f32.gmra.mrb[0].mxu0 %v203
    %v461 = vpop.f32.mrb[0].mxu0
    %v462 = vadd.f32 0.0, %v461
    %v463 = vpop.f32.mrb[0].mxu0
    %464 = vmatprep.mubr.f32.mxu0 0.0
    %465 = vmatmul.mubr.f32.gmra.mrb[0].mxu0 %v204
    %v466 = vpop.f32.mrb[0].mxu0
    %v467 = vadd.f32 0.0, %v466
    %v468 = vpop.f32.mrb[0].mxu0
    %469 = vmatprep.mubr.f32.mxu0 0.0
    %470 = vmatmul.mubr.f32.gmra.mrb[0].mxu0 %v205
    %v471 = vpop.f32.mrb[0].mxu0
    %v472 = vadd.f32 0.0, %v471
    %v473 = vpop.f32.mrb[0].mxu0
    %474 = vmatprep.mubr.f32.mxu0 0.0
    %475 = vmatmul.mubr.f32.gmra.mrb[0].mxu0 %v206
    %v476 = vpop.f32.mrb[0].mxu0
    %v477 = vadd.f32 0.0, %v476
    %v478 = vpop.f32.mrb[0].mxu0
    %479 = vmatprep.mubr.f32.mxu0 0.0
    %480 = vmatmul.mubr.f32.gmra.mrb[0].mxu0 %v207
    %v481 = vpop.f32.mrb[0].mxu0
    %v482 = vadd.f32 0.0, %v481
    %v483 = vpop.f32.mrb[0].mxu0
    %484 = vmatprep.mubr.f32.mxu0 0.0
    %485 = vmatmul.mubr.f32.gmra.mrb[0].mxu0 %v208
    %v486 = vpop.f32.mrb[0].mxu0
    %v487 = vadd.f32 0.0, %v486
    %v488 = vpop.f32.mrb[0].mxu0
    %489 = vmatprep.mubr.f32.mxu0 0.0
    %490 = vmatmul.mubr.f32.gmra.mrb[0].mxu0 %v209
    %v491 = vpop.f32.mrb[0].mxu0
    %v492 = vadd.f32 0.0, %v491
    %v493 = vpop.f32.mrb[0].mxu0
    %494 = vmatprep.mubr.f32.mxu0 0.0
    %495 = vmatmul.mubr.f32.gmra.mrb[0].mxu0 %v210
    %v496 = vpop.f32.mrb[0].mxu0
    %v497 = vadd.f32 0.0, %v496
    %v498 = vpop.f32.mrb[0].mxu0
    %499 = vmatprep.mubr.f32.mxu0 0.0
    %500 = vmatmul.mubr.f32.gmra.mrb[0].mxu0 %v211
    %v501 = vpop.f32.mrb[0].mxu0
    %v502 = vadd.f32 0.0, %v501
    %v503 = vpop.f32.mrb[0].mxu0
    %504 = vmatprep.mubr.f32.mxu0 0.0
    %505 = vmatmul.mubr.f32.gmra.mrb[0].mxu0 %v212
    %v506 = vpop.f32.mrb[0].mxu0
    %v507 = vadd.f32 0.0, %v506
    %v508 = vpop.f32.mrb[0].mxu0
    %509 = vmatprep.mubr.f32.mxu0 0.0
    %510 = vmatmul.mubr.f32.gmra.mrb[0].mxu0 %v213
    %v511 = vpop.f32.mrb[0].mxu0
    %v512 = vadd.f32 0.0, %v511
    %v513 = vpop.f32.mrb[0].mxu0
    %514 = vmatprep.mubr.f32.mxu0 0.0
    %515 = vmatmul.mubr.f32.gmra.mrb[0].mxu0 %v214
    %v516 = vpop.f32.mrb[0].mxu0
    %v517 = vadd.f32 0.0, %v516
    %v518 = vpop.f32.mrb[0].mxu0
    %519 = vmatprep.mubr.f32.mxu0 0.0
    %520 = vmatmul.mubr.f32.gmra.mrb[0].mxu0 %v215
    %v521 = vpop.f32.mrb[0].mxu0
    %v522 = vadd.f32 0.0, %v521
    %v523 = vpop.f32.mrb[0].mxu0
    %524 = vmatprep.mubr.f32.mxu0 0.0
    %525 = vmatmul.mubr.f32.gmra.mrb[0].mxu0 %v216
    %v526 = vpop.f32.mrb[0].mxu0
    %v527 = vadd.f32 0.0, %v526
    %v528 = vpop.f32.mrb[0].mxu0
    %529 = vmatprep.mubr.f32.mxu0 0.0
    %530 = vmatmul.mubr.f32.gmra.mrb[0].mxu0 %v217
    %v531 = vpop.f32.mrb[0].mxu0
    %v532 = vadd.f32 0.0, %v531
    %v533 = vpop.f32.mrb[0].mxu0
    %534 = vmatprep.mubr.f32.mxu0 0.0
    %535 = vmatmul.mubr.f32.gmra.mrb[0].mxu0 %v218
    %v536 = vpop.f32.mrb[0].mxu0
    %v537 = vadd.f32 0.0, %v536
    %v538 = vpop.f32.mrb[0].mxu0
    %539 = vmatprep.mubr.f32.mxu0 0.0
    %540 = vmatmul.mubr.f32.gmra.mrb[0].mxu0 %v219
    %v541 = vpop.f32.mrb[0].mxu0
    %v542 = vadd.f32 0.0, %v541
    %v543 = vpop.f32.mrb[0].mxu0
    %544 = vmatprep.mubr.f32.mxu0 0.0
    %545 = vmatmul.mubr.f32.gmra.mrb[0].mxu0 %v220
    %v546 = vpop.f32.mrb[0].mxu0
    %v547 = vadd.f32 0.0, %v546
    %v548 = vpop.f32.mrb[0].mxu0
    %549 = vmatprep.mubr.f32.mxu0 0.0
    %550 = vmatmul.mubr.f32.gmra.mrb[0].mxu0 %v221
    %v551 = vpop.f32.mrb[0].mxu0
    %v552 = vadd.f32 0.0, %v551
    %v553 = vpop.f32.mrb[0].mxu0
    %554 = vmatprep.mubr.f32.mxu0 0.0
    %555 = vmatmul.mubr.f32.gmra.mrb[0].mxu0 %v222
    %v556 = vpop.f32.mrb[0].mxu0
    %v557 = vadd.f32 0.0, %v556
    %v558 = vpop.f32.mrb[0].mxu0
    %559 = vmatprep.mubr.f32.mxu0 0.0
    %560 = vmatmul.mubr.f32.gmra.mrb[0].mxu0 %v223
    %v561 = vpop.f32.mrb[0].mxu0
    %v562 = vadd.f32 0.0, %v561
    %v563 = vpop.f32.mrb[0].mxu0
    %564 = vmatprep.mubr.f32.mxu0 0.0
    %565 = vmatmul.mubr.f32.gmra.mrb[0].mxu0 %v224
    %v566 = vpop.f32.mrb[0].mxu0
    %v567 = vadd.f32 0.0, %v566
    %v568 = vpop.f32.mrb[0].mxu0
    %569 = vmatprep.mubr.f32.mxu0 0.0
    %570 = vmatmul.mubr.f32.gmra.mrb[0].mxu0 %v225
    %v571 = vpop.f32.mrb[0].mxu0
    %v572 = vadd.f32 0.0, %v571
    %v573 = vpop.f32.mrb[0].mxu0
    %574 = vmatprep.mubr.f32.mxu0 0.0
    %575 = vmatmul.mubr.f32.gmra.mrb[0].mxu0 %v226
    %v576 = vpop.f32.mrb[0].mxu0
    %v577 = vadd.f32 0.0, %v576
    %v578 = vpop.f32.mrb[0].mxu0
    %579 = vmatprep.mubr.f32.mxu0 0.0
    %580 = vmatmul.mubr.f32.gmra.mrb[0].mxu0 %v227
    %v581 = vpop.f32.mrb[0].mxu0
    %v582 = vadd.f32 0.0, %v581
    %v583 = vpop.f32.mrb[0].mxu0
    %584 = vmatprep.mubr.f32.mxu0 0.0
    %585 = vmatmul.mubr.f32.gmra.mrb[0].mxu0 %v228
    %v586 = vpop.f32.mrb[0].mxu0
    %v587 = vadd.f32 0.0, %v586
    %v588 = vpop.f32.mrb[0].mxu0
    %589 = vmatprep.mubr.f32.mxu0 0.0
    %590 = vmatmul.mubr.f32.gmra.mrb[0].mxu0 %v229
    %v591 = vpop.f32.mrb[0].mxu0
    %v592 = vadd.f32 0.0, %v591
    %v593 = vpop.f32.mrb[0].mxu0
    %594 = vmatprep.mubr.f32.mxu0 0.0
    %595 = vmatmul.mubr.f32.gmra.mrb[0].mxu0 %v230
    %v596 = vpop.f32.mrb[0].mxu0
    %v597 = vadd.f32 0.0, %v596
    %v598 = vpop.f32.mrb[0].mxu0
    %599 = vmatprep.mubr.f32.mxu0 0.0
    %600 = vmatmul.mubr.f32.gmra.mrb[0].mxu0 %v231
    %v601 = vpop.f32.mrb[0].mxu0
    %v602 = vadd.f32 0.0, %v601
    %v603 = vpop.f32.mrb[0].mxu0
    %604 = vmatprep.mubr.f32.mxu0 0.0
    %605 = vmatmul.mubr.f32.gmra.mrb[0].mxu0 %v232
    %v606 = vpop.f32.mrb[0].mxu0
    %v607 = vadd.f32 0.0, %v606
    %v608 = vpop.f32.mrb[0].mxu0
    %609 = vmatprep.mubr.f32.mxu0 0.0
    %610 = vmatmul.mubr.f32.gmra.mrb[0].mxu0 %v233
    %v611 = vpop.f32.mrb[0].mxu0
    %v612 = vadd.f32 0.0, %v611
    %v613 = vpop.f32.mrb[0].mxu0
    %614 = vmatprep.mubr.f32.mxu0 0.0
    %615 = vmatmul.mubr.f32.gmra.mrb[0].mxu0 %v234
    %v616 = vpop.f32.mrb[0].mxu0
    %v617 = vadd.f32 0.0, %v616
    %v618 = vpop.f32.mrb[0].mxu0
    %619 = vmatprep.mubr.f32.mxu0 0.0
    %620 = vmatmul.mubr.f32.gmra.mrb[0].mxu0 %v235
    %v621 = vpop.f32.mrb[0].mxu0
    %v622 = vadd.f32 0.0, %v621
    %v623 = vpop.f32.mrb[0].mxu0
    %624 = vmatprep.mubr.f32.mxu0 0.0
    %625 = vmatmul.mubr.f32.gmra.mrb[0].mxu0 %v236
    %v626 = vpop.f32.mrb[0].mxu0
    %v627 = vadd.f32 0.0, %v626
    %v628 = vpop.f32.mrb[0].mxu0
    %629 = vmatprep.mubr.f32.mxu0 0.0
    %630 = vmatmul.mubr.f32.gmra.mrb[0].mxu0 %v237
    %v631 = vpop.f32.mrb[0].mxu0
    %v632 = vadd.f32 0.0, %v631
    %v633 = vpop.f32.mrb[0].mxu0
    %634 = vmatprep.mubr.f32.mxu0 0.0
    %635 = vmatmul.mubr.f32.gmra.mrb[0].mxu0 %v238
    %v636 = vpop.f32.mrb[0].mxu0
    %v637 = vadd.f32 0.0, %v636
    %v638 = vpop.f32.mrb[0].mxu0
    %639 = vdwg.mxu0
    %v640 = vadd.f32 %v111, %v322
    %v641 = vadd.f32 %v112, %v327
    %v642 = vadd.f32 %v113, %v332
    %v643 = vadd.f32 %v114, %v337
    %v644 = vadd.f32 %v115, %v342
    %v645 = vadd.f32 %v116, %v347
    %v646 = vadd.f32 %v117, %v352
    %v647 = vadd.f32 %v118, %v357
    %v648 = vadd.f32 %v119, %v362
    %v649 = vadd.f32 %v120, %v367
    %v650 = vadd.f32 %v121, %v372
    %v651 = vadd.f32 %v122, %v377
    %v652 = vadd.f32 %v123, %v382
    %v653 = vadd.f32 %v124, %v387
    %v654 = vadd.f32 %v125, %v392
    %v655 = vadd.f32 %v126, %v397
    %v656 = vadd.f32 %v127, %v402
    %v657 = vadd.f32 %v128, %v407
    %v658 = vadd.f32 %v129, %v412
    %v659 = vadd.f32 %v130, %v417
    %v660 = vadd.f32 %v131, %v422
    %v661 = vadd.f32 %v132, %v427
    %v662 = vadd.f32 %v133, %v432
    %v663 = vadd.f32 %v134, %v437
    %v664 = vadd.f32 %v135, %v442
    %v665 = vadd.f32 %v136, %v447
    %v666 = vadd.f32 %v137, %v452
    %v667 = vadd.f32 %v138, %v457
    %v668 = vadd.f32 %v139, %v462
    %v669 = vadd.f32 %v140, %v467
    %v670 = vadd.f32 %v141, %v472
    %v671 = vadd.f32 %v142, %v477
    %v672 = vadd.f32 %v143, %v482
    %v673 = vadd.f32 %v144, %v487
    %v674 = vadd.f32 %v145, %v492
    %v675 = vadd.f32 %v146, %v497
    %v676 = vadd.f32 %v147, %v502
    %v677 = vadd.f32 %v148, %v507
    %v678 = vadd.f32 %v149, %v512
    %v679 = vadd.f32 %v150, %v517
    %v680 = vadd.f32 %v151, %v522
    %v681 = vadd.f32 %v152, %v527
    %v682 = vadd.f32 %v153, %v532
    %v683 = vadd.f32 %v154, %v537
    %v684 = vadd.f32 %v155, %v542
    %v685 = vadd.f32 %v156, %v547
    %v686 = vadd.f32 %v157, %v552
    %v687 = vadd.f32 %v158, %v557
    %v688 = vadd.f32 %v159, %v562
    %v689 = vadd.f32 %v160, %v567
    %v690 = vadd.f32 %v161, %v572
    %v691 = vadd.f32 %v162, %v577
    %v692 = vadd.f32 %v163, %v582
    %v693 = vadd.f32 %v164, %v587
    %v694 = vadd.f32 %v165, %v592
    %v695 = vadd.f32 %v166, %v597
    %v696 = vadd.f32 %v167, %v602
    %v697 = vadd.f32 %v168, %v607
    %v698 = vadd.f32 %v169, %v612
    %v699 = vadd.f32 %v170, %v617
    %v700 = vadd.f32 %v171, %v622
    %v701 = vadd.f32 %v172, %v627
    %v702 = vadd.f32 %v173, %v632
    %v703 = vadd.f32 %v174, %v637
    %704 = vst [vmem:[#allocation2] sm:$0xff] %v640
    %705 = vst [vmem:[#allocation2 + $0x8] sm:$0xff] %v641
    %706 = vst [vmem:[#allocation2 + $0x10] sm:$0xff] %v642
    %707 = vst [vmem:[#allocation2 + $0x18] sm:$0xff] %v643
    %708 = vst [vmem:[#allocation2 + $0x20] sm:$0xff] %v644
    %709 = vst [vmem:[#allocation2 + $0x28] sm:$0xff] %v645
    %710 = vst [vmem:[#allocation2 + $0x30] sm:$0xff] %v646
    %711 = vst [vmem:[#allocation2 + $0x38] sm:$0xff] %v647
    %712 = vst [vmem:[#allocation2 + $0x40] sm:$0xff] %v648
    %713 = vst [vmem:[#allocation2 + $0x48] sm:$0xff] %v649
    %714 = vst [vmem:[#allocation2 + $0x50] sm:$0xff] %v650
    %715 = vst [vmem:[#allocation2 + $0x58] sm:$0xff] %v651
    %716 = vst [vmem:[#allocation2 + $0x60] sm:$0xff] %v652
    %717 = vst [vmem:[#allocation2 + $0x68] sm:$0xff] %v653
    %718 = vst [vmem:[#allocation2 + $0x70] sm:$0xff] %v654
    %719 = vst [vmem:[#allocation2 + $0x78] sm:$0xff] %v655
    %720 = vst [vmem:[#allocation2 + $0x80] sm:$0xff] %v656
    %721 = vst [vmem:[#allocation2 + $0x88] sm:$0xff] %v657
    %722 = vst [vmem:[#allocation2 + $0x90] sm:$0xff] %v658
    %723 = vst [vmem:[#allocation2 + $0x98] sm:$0xff] %v659
    %724 = vst [vmem:[#allocation2 + $0xa0] sm:$0xff] %v660
    %725 = vst [vmem:[#allocation2 + $0xa8] sm:$0xff] %v661
    %726 = vst [vmem:[#allocation2 + $0xb0] sm:$0xff] %v662
    %727 = vst [vmem:[#allocation2 + $0xb8] sm:$0xff] %v663
    %728 = vst [vmem:[#allocation2 + $0xc0] sm:$0xff] %v664
    %729 = vst [vmem:[#allocation2 + $0xc8] sm:$0xff] %v665
    %730 = vst [vmem:[#allocation2 + $0xd0] sm:$0xff] %v666
    %731 = vst [vmem:[#allocation2 + $0xd8] sm:$0xff] %v667
    %732 = vst [vmem:[#allocation2 + $0xe0] sm:$0xff] %v668
    %733 = vst [vmem:[#allocation2 + $0xe8] sm:$0xff] %v669
    %734 = vst [vmem:[#allocation2 + $0xf0] sm:$0xff] %v670
    %735 = vst [vmem:[#allocation2 + $0xf8] sm:$0xff] %v671
    %736 = vst [vmem:[#allocation2 + $0x100] sm:$0xff] %v672
    %737 = vst [vmem:[#allocation2 + $0x108] sm:$0xff] %v673
    %738 = vst [vmem:[#allocation2 + $0x110] sm:$0xff] %v674
    %739 = vst [vmem:[#allocation2 + $0x118] sm:$0xff] %v675
    %740 = vst [vmem:[#allocation2 + $0x120] sm:$0xff] %v676
    %741 = vst [vmem:[#allocation2 + $0x128] sm:$0xff] %v677
    %742 = vst [vmem:[#allocation2 + $0x130] sm:$0xff] %v678
    %743 = vst [vmem:[#allocation2 + $0x138] sm:$0xff] %v679
    %744 = vst [vmem:[#allocation2 + $0x140] sm:$0xff] %v680
    %745 = vst [vmem:[#allocation2 + $0x148] sm:$0xff] %v681
    %746 = vst [vmem:[#allocation2 + $0x150] sm:$0xff] %v682
    %747 = vst [vmem:[#allocation2 + $0x158] sm:$0xff] %v683
    %748 = vst [vmem:[#allocation2 + $0x160] sm:$0xff] %v684
    %749 = vst [vmem:[#allocation2 + $0x168] sm:$0xff] %v685
    %750 = vst [vmem:[#allocation2 + $0x170] sm:$0xff] %v686
    %751 = vst [vmem:[#allocation2 + $0x178] sm:$0xff] %v687
    %752 = vst [vmem:[#allocation2 + $0x180] sm:$0xff] %v688
    %753 = vst [vmem:[#allocation2 + $0x188] sm:$0xff] %v689
    %754 = vst [vmem:[#allocation2 + $0x190] sm:$0xff] %v690
    %755 = vst [vmem:[#allocation2 + $0x198] sm:$0xff] %v691
    %756 = vst [vmem:[#allocation2 + $0x1a0] sm:$0xff] %v692
    %757 = vst [vmem:[#allocation2 + $0x1a8] sm:$0xff] %v693
    %758 = vst [vmem:[#allocation2 + $0x1b0] sm:$0xff] %v694
    %759 = vst [vmem:[#allocation2 + $0x1b8] sm:$0xff] %v695
    %760 = vst [vmem:[#allocation2 + $0x1c0] sm:$0xff] %v696
    %761 = vst [vmem:[#allocation2 + $0x1c8] sm:$0xff] %v697
    %762 = vst [vmem:[#allocation2 + $0x1d0] sm:$0xff] %v698
    %763 = vst [vmem:[#allocation2 + $0x1d8] sm:$0xff] %v699
    %764 = vst [vmem:[#allocation2 + $0x1e0] sm:$0xff] %v700
    %765 = vst [vmem:[#allocation2 + $0x1e8] sm:$0xff] %v701
    %766 = vst [vmem:[#allocation2 + $0x1f0] sm:$0xff] %v702
    %767 = vst [vmem:[#allocation2 + $0x1f8] sm:$0xff] %v703
    // Predicated region
    $region26: #{tpu_custom_call.1} parent=1 // pred_check
      %p768 = pneg %p43
    $region27: #{tpu_custom_call.1} parent=1 // pred_check_branch
      %770 = sbr.rel (%p768) target = $region29
    $region28: #{tpu_custom_call.1} parent=1 // pred_region
      %v771 = vld [vmem:[#allocation2] sm:$0xff]
      %v772 = vld [vmem:[#allocation2 + $0x8] sm:$0xff]
      %v773 = vld [vmem:[#allocation2 + $0x10] sm:$0xff]
      %v774 = vld [vmem:[#allocation2 + $0x18] sm:$0xff]
      %v775 = vld [vmem:[#allocation2 + $0x20] sm:$0xff]
      %v776 = vld [vmem:[#allocation2 + $0x28] sm:$0xff]
      %v777 = vld [vmem:[#allocation2 + $0x30] sm:$0xff]
      %v778 = vld [vmem:[#allocation2 + $0x38] sm:$0xff]
      %v779 = vld [vmem:[#allocation2 + $0x40] sm:$0xff]
      %v780 = vld [vmem:[#allocation2 + $0x48] sm:$0xff]
      %v781 = vld [vmem:[#allocation2 + $0x50] sm:$0xff]
      %v782 = vld [vmem:[#allocation2 + $0x58] sm:$0xff]
      %v783 = vld [vmem:[#allocation2 + $0x60] sm:$0xff]
      %v784 = vld [vmem:[#allocation2 + $0x68] sm:$0xff]
      %v785 = vld [vmem:[#allocation2 + $0x70] sm:$0xff]
      %v786 = vld [vmem:[#allocation2 + $0x78] sm:$0xff]
      %v787 = vld [vmem:[#allocation2 + $0x80] sm:$0xff]
      %v788 = vld [vmem:[#allocation2 + $0x88] sm:$0xff]
      %v789 = vld [vmem:[#allocation2 + $0x90] sm:$0xff]
      %v790 = vld [vmem:[#allocation2 + $0x98] sm:$0xff]
      %v791 = vld [vmem:[#allocation2 + $0xa0] sm:$0xff]
      %v792 = vld [vmem:[#allocation2 + $0xa8] sm:$0xff]
      %v793 = vld [vmem:[#allocation2 + $0xb0] sm:$0xff]
      %v794 = vld [vmem:[#allocation2 + $0xb8] sm:$0xff]
      %v795 = vld [vmem:[#allocation2 + $0xc0] sm:$0xff]
      %v796 = vld [vmem:[#allocation2 + $0xc8] sm:$0xff]
      %v797 = vld [vmem:[#allocation2 + $0xd0] sm:$0xff]
      %v798 = vld [vmem:[#allocation2 + $0xd8] sm:$0xff]
      %v799 = vld [vmem:[#allocation2 + $0xe0] sm:$0xff]
      %v800 = vld [vmem:[#allocation2 + $0xe8] sm:$0xff]
      %v801 = vld [vmem:[#allocation2 + $0xf0] sm:$0xff]
      %v802 = vld [vmem:[#allocation2 + $0xf8] sm:$0xff]
      %v803 = vld [vmem:[#allocation2 + $0x100] sm:$0xff]
      %v804 = vld [vmem:[#allocation2 + $0x108] sm:$0xff]
      %v805 = vld [vmem:[#allocation2 + $0x110] sm:$0xff]
      %v806 = vld [vmem:[#allocation2 + $0x118] sm:$0xff]
      %v807 = vld [vmem:[#allocation2 + $0x120] sm:$0xff]
      %v808 = vld [vmem:[#allocation2 + $0x128] sm:$0xff]
      %v809 = vld [vmem:[#allocation2 + $0x130] sm:$0xff]
      %v810 = vld [vmem:[#allocation2 + $0x138] sm:$0xff]
      %v811 = vld [vmem:[#allocation2 + $0x140] sm:$0xff]
      %v812 = vld [vmem:[#allocation2 + $0x148] sm:$0xff]
      %v813 = vld [vmem:[#allocation2 + $0x150] sm:$0xff]
      %v814 = vld [vmem:[#allocation2 + $0x158] sm:$0xff]
      %v815 = vld [vmem:[#allocation2 + $0x160] sm:$0xff]
      %v816 = vld [vmem:[#allocation2 + $0x168] sm:$0xff]
      %v817 = vld [vmem:[#allocation2 + $0x170] sm:$0xff]
      %v818 = vld [vmem:[#allocation2 + $0x178] sm:$0xff]
      %v819 = vld [vmem:[#allocation2 + $0x180] sm:$0xff]
      %v820 = vld [vmem:[#allocation2 + $0x188] sm:$0xff]
      %v821 = vld [vmem:[#allocation2 + $0x190] sm:$0xff]
      %v822 = vld [vmem:[#allocation2 + $0x198] sm:$0xff]
      %v823 = vld [vmem:[#allocation2 + $0x1a0] sm:$0xff]
      %v824 = vld [vmem:[#allocation2 + $0x1a8] sm:$0xff]
      %v825 = vld [vmem:[#allocation2 + $0x1b0] sm:$0xff]
      %v826 = vld [vmem:[#allocation2 + $0x1b8] sm:$0xff]
      %v827 = vld [vmem:[#allocation2 + $0x1c0] sm:$0xff]
      %v828 = vld [vmem:[#allocation2 + $0x1c8] sm:$0xff]
      %v829 = vld [vmem:[#allocation2 + $0x1d0] sm:$0xff]
      %v830 = vld [vmem:[#allocation2 + $0x1d8] sm:$0xff]
      %v831 = vld [vmem:[#allocation2 + $0x1e0] sm:$0xff]
      %v832 = vld [vmem:[#allocation2 + $0x1e8] sm:$0xff]
      %v833 = vld [vmem:[#allocation2 + $0x1f0] sm:$0xff]
      %v834 = vld [vmem:[#allocation2 + $0x1f8] sm:$0xff]
      %v835 = vld [vmem:[%s2] sm:$0x1]
      %v837 = vlaneseq
      %v838 = vshrl.u32 %v837, 7
      %v839 = vsub.s32 0, %v838
      %v840 = vrot.slane %v835, %v839
      %v842 = vadd.f32 %v771, %v840
      %v843 = vadd.f32 %v772, %v840
      %v844 = vadd.f32 %v773, %v840
      %v845 = vadd.f32 %v774, %v840
      %v846 = vadd.f32 %v775, %v840
      %v847 = vadd.f32 %v776, %v840
      %v848 = vadd.f32 %v777, %v840
      %v849 = vadd.f32 %v778, %v840
      %v850 = vadd.f32 %v779, %v840
      %v851 = vadd.f32 %v780, %v840
      %v852 = vadd.f32 %v781, %v840
      %v853 = vadd.f32 %v782, %v840
      %v854 = vadd.f32 %v783, %v840
      %v855 = vadd.f32 %v784, %v840
      %v856 = vadd.f32 %v785, %v840
      %v857 = vadd.f32 %v786, %v840
      %v858 = vadd.f32 %v787, %v840
      %v859 = vadd.f32 %v788, %v840
      %v860 = vadd.f32 %v789, %v840
      %v861 = vadd.f32 %v790, %v840
      %v862 = vadd.f32 %v791, %v840
      %v863 = vadd.f32 %v792, %v840
      %v864 = vadd.f32 %v793, %v840
      %v865 = vadd.f32 %v794, %v840
      %v866 = vadd.f32 %v795, %v840
      %v867 = vadd.f32 %v796, %v840
      %v868 = vadd.f32 %v797, %v840
      %v869 = vadd.f32 %v798, %v840
      %v870 = vadd.f32 %v799, %v840
      %v871 = vadd.f32 %v800, %v840
      %v872 = vadd.f32 %v801, %v840
      %v873 = vadd.f32 %v802, %v840
      %v874 = vadd.f32 %v803, %v840
      %v875 = vadd.f32 %v804, %v840
      %v876 = vadd.f32 %v805, %v840
      %v877 = vadd.f32 %v806, %v840
      %v878 = vadd.f32 %v807, %v840
      %v879 = vadd.f32 %v808, %v840
      %v880 = vadd.f32 %v809, %v840
      %v881 = vadd.f32 %v810, %v840
      %v882 = vadd.f32 %v811, %v840
      %v883 = vadd.f32 %v812, %v840
      %v884 = vadd.f32 %v813, %v840
      %v885 = vadd.f32 %v814, %v840
      %v886 = vadd.f32 %v815, %v840
      %v887 = vadd.f32 %v816, %v840
      %v888 = vadd.f32 %v817, %v840
      %v889 = vadd.f32 %v818, %v840
      %v890 = vadd.f32 %v819, %v840
      %v891 = vadd.f32 %v820, %v840
      %v892 = vadd.f32 %v821, %v840
      %v893 = vadd.f32 %v822, %v840
      %v894 = vadd.f32 %v823, %v840
      %v895 = vadd.f32 %v824, %v840
      %v896 = vadd.f32 %v825, %v840
      %v897 = vadd.f32 %v826, %v840
      %v898 = vadd.f32 %v827, %v840
      %v899 = vadd.f32 %v828, %v840
      %v900 = vadd.f32 %v829, %v840
      %v901 = vadd.f32 %v830, %v840
      %v902 = vadd.f32 %v831, %v840
      %v903 = vadd.f32 %v832, %v840
      %v904 = vadd.f32 %v833, %v840
      %v905 = vadd.f32 %v834, %v840
      %v906 = vmax.f32 %v842, 0.0
      %v907 = vmax.f32 %v843, 0.0
      %v908 = vmax.f32 %v844, 0.0
      %v909 = vmax.f32 %v845, 0.0
      %v910 = vmax.f32 %v846, 0.0
      %v911 = vmax.f32 %v847, 0.0
      %v912 = vmax.f32 %v848, 0.0
      %v913 = vmax.f32 %v849, 0.0
      %v914 = vmax.f32 %v850, 0.0
      %v915 = vmax.f32 %v851, 0.0
      %v916 = vmax.f32 %v852, 0.0
      %v917 = vmax.f32 %v853, 0.0
      %v918 = vmax.f32 %v854, 0.0
      %v919 = vmax.f32 %v855, 0.0
      %v920 = vmax.f32 %v856, 0.0
      %v921 = vmax.f32 %v857, 0.0
      %v922 = vmax.f32 %v858, 0.0
      %v923 = vmax.f32 %v859, 0.0
      %v924 = vmax.f32 %v860, 0.0
      %v925 = vmax.f32 %v861, 0.0
      %v926 = vmax.f32 %v862, 0.0
      %v927 = vmax.f32 %v863, 0.0
      %v928 = vmax.f32 %v864, 0.0
      %v929 = vmax.f32 %v865, 0.0
      %v930 = vmax.f32 %v866, 0.0
      %v931 = vmax.f32 %v867, 0.0
      %v932 = vmax.f32 %v868, 0.0
      %v933 = vmax.f32 %v869, 0.0
      %v934 = vmax.f32 %v870, 0.0
      %v935 = vmax.f32 %v871, 0.0
      %v936 = vmax.f32 %v872, 0.0
      %v937 = vmax.f32 %v873, 0.0
      %v938 = vmax.f32 %v874, 0.0
      %v939 = vmax.f32 %v875, 0.0
      %v940 = vmax.f32 %v876, 0.0
      %v941 = vmax.f32 %v877, 0.0
      %v942 = vmax.f32 %v878, 0.0
      %v943 = vmax.f32 %v879, 0.0
      %v944 = vmax.f32 %v880, 0.0
      %v945 = vmax.f32 %v881, 0.0
      %v946 = vmax.f32 %v882, 0.0
      %v947 = vmax.f32 %v883, 0.0
      %v948 = vmax.f32 %v884, 0.0
      %v949 = vmax.f32 %v885, 0.0
      %v950 = vmax.f32 %v886, 0.0
      %v951 = vmax.f32 %v887, 0.0
      %v952 = vmax.f32 %v888, 0.0
      %v953 = vmax.f32 %v889, 0.0
      %v954 = vmax.f32 %v890, 0.0
      %v955 = vmax.f32 %v891, 0.0
      %v956 = vmax.f32 %v892, 0.0
      %v957 = vmax.f32 %v893, 0.0
      %v958 = vmax.f32 %v894, 0.0
      %v959 = vmax.f32 %v895, 0.0
      %v960 = vmax.f32 %v896, 0.0
      %v961 = vmax.f32 %v897, 0.0
      %v962 = vmax.f32 %v898, 0.0
      %v963 = vmax.f32 %v899, 0.0
      %v964 = vmax.f32 %v900, 0.0
      %v965 = vmax.f32 %v901, 0.0
      %v966 = vmax.f32 %v902, 0.0
      %v967 = vmax.f32 %v903, 0.0
      %v968 = vmax.f32 %v904, 0.0
      %v969 = vmax.f32 %v905, 0.0
      %970 = vst [vmem:[#allocation8] sm:$0xff] %v906
      %971 = vst [vmem:[#allocation8 + $0x8] sm:$0xff] %v907
      %972 = vst [vmem:[#allocation8 + $0x10] sm:$0xff] %v908
      %973 = vst [vmem:[#allocation8 + $0x18] sm:$0xff] %v909
      %974 = vst [vmem:[#allocation8 + $0x20] sm:$0xff] %v910
      %975 = vst [vmem:[#allocation8 + $0x28] sm:$0xff] %v911
      %976 = vst [vmem:[#allocation8 + $0x30] sm:$0xff] %v912
      %977 = vst [vmem:[#allocation8 + $0x38] sm:$0xff] %v913
      %978 = vst [vmem:[#allocation8 + $0x40] sm:$0xff] %v914
      %979 = vst [vmem:[#allocation8 + $0x48] sm:$0xff] %v915
      %980 = vst [vmem:[#allocation8 + $0x50] sm:$0xff] %v916
      %981 = vst [vmem:[#allocation8 + $0x58] sm:$0xff] %v917
      %982 = vst [vmem:[#allocation8 + $0x60] sm:$0xff] %v918
      %983 = vst [vmem:[#allocation8 + $0x68] sm:$0xff] %v919
      %984 = vst [vmem:[#allocation8 + $0x70] sm:$0xff] %v920
      %985 = vst [vmem:[#allocation8 + $0x78] sm:$0xff] %v921
      %986 = vst [vmem:[#allocation8 + $0x80] sm:$0xff] %v922
      %987 = vst [vmem:[#allocation8 + $0x88] sm:$0xff] %v923
      %988 = vst [vmem:[#allocation8 + $0x90] sm:$0xff] %v924
      %989 = vst [vmem:[#allocation8 + $0x98] sm:$0xff] %v925
      %990 = vst [vmem:[#allocation8 + $0xa0] sm:$0xff] %v926
      %991 = vst [vmem:[#allocation8 + $0xa8] sm:$0xff] %v927
      %992 = vst [vmem:[#allocation8 + $0xb0] sm:$0xff] %v928
      %993 = vst [vmem:[#allocation8 + $0xb8] sm:$0xff] %v929
      %994 = vst [vmem:[#allocation8 + $0xc0] sm:$0xff] %v930
      %995 = vst [vmem:[#allocation8 + $0xc8] sm:$0xff] %v931
      %996 = vst [vmem:[#allocation8 + $0xd0] sm:$0xff] %v932
      %997 = vst [vmem:[#allocation8 + $0xd8] sm:$0xff] %v933
      %998 = vst [vmem:[#allocation8 + $0xe0] sm:$0xff] %v934
      %999 = vst [vmem:[#allocation8 + $0xe8] sm:$0xff] %v935
      %1000 = vst [vmem:[#allocation8 + $0xf0] sm:$0xff] %v936
      %1001 = vst [vmem:[#allocation8 + $0xf8] sm:$0xff] %v937
      %1002 = vst [vmem:[#allocation8 + $0x100] sm:$0xff] %v938
      %1003 = vst [vmem:[#allocation8 + $0x108] sm:$0xff] %v939
      %1004 = vst [vmem:[#allocation8 + $0x110] sm:$0xff] %v940
      %1005 = vst [vmem:[#allocation8 + $0x118] sm:$0xff] %v941
      %1006 = vst [vmem:[#allocation8 + $0x120] sm:$0xff] %v942
      %1007 = vst [vmem:[#allocation8 + $0x128] sm:$0xff] %v943
      %1008 = vst [vmem:[#allocation8 + $0x130] sm:$0xff] %v944
      %1009 = vst [vmem:[#allocation8 + $0x138] sm:$0xff] %v945
      %1010 = vst [vmem:[#allocation8 + $0x140] sm:$0xff] %v946
      %1011 = vst [vmem:[#allocation8 + $0x148] sm:$0xff] %v947
      %1012 = vst [vmem:[#allocation8 + $0x150] sm:$0xff] %v948
      %1013 = vst [vmem:[#allocation8 + $0x158] sm:$0xff] %v949
      %1014 = vst [vmem:[#allocation8 + $0x160] sm:$0xff] %v950
      %1015 = vst [vmem:[#allocation8 + $0x168] sm:$0xff] %v951
      %1016 = vst [vmem:[#allocation8 + $0x170] sm:$0xff] %v952
      %1017 = vst [vmem:[#allocation8 + $0x178] sm:$0xff] %v953
      %1018 = vst [vmem:[#allocation8 + $0x180] sm:$0xff] %v954
      %1019 = vst [vmem:[#allocation8 + $0x188] sm:$0xff] %v955
      %1020 = vst [vmem:[#allocation8 + $0x190] sm:$0xff] %v956
      %1021 = vst [vmem:[#allocation8 + $0x198] sm:$0xff] %v957
      %1022 = vst [vmem:[#allocation8 + $0x1a0] sm:$0xff] %v958
      %1023 = vst [vmem:[#allocation8 + $0x1a8] sm:$0xff] %v959
      %1024 = vst [vmem:[#allocation8 + $0x1b0] sm:$0xff] %v960
      %1025 = vst [vmem:[#allocation8 + $0x1b8] sm:$0xff] %v961
      %1026 = vst [vmem:[#allocation8 + $0x1c0] sm:$0xff] %v962
      %1027 = vst [vmem:[#allocation8 + $0x1c8] sm:$0xff] %v963
      %1028 = vst [vmem:[#allocation8 + $0x1d0] sm:$0xff] %v964
      %1029 = vst [vmem:[#allocation8 + $0x1d8] sm:$0xff] %v965
      %1030 = vst [vmem:[#allocation8 + $0x1e0] sm:$0xff] %v966
      %1031 = vst [vmem:[#allocation8 + $0x1e8] sm:$0xff] %v967
      %1032 = vst [vmem:[#allocation8 + $0x1f0] sm:$0xff] %v968
      %1033 = vst [vmem:[#allocation8 + $0x1f8] sm:$0xff] %v969
    $region29: #{tpu_custom_call.1} parent=1 // pred_fallthru
      _
    // Predicated region
    $region30: #{tpu_custom_call.1} parent=1 // pred_check
      _
    $region31: #{tpu_custom_call.1} parent=1 // pred_check_branch
      %1035 = sbr.rel (0) target = $region33
    $region32: #{tpu_custom_call.1} parent=1 // pred_region
      %s1037 = ssub.s32 8192, 8192
      %1038 = vsyncadd [#allocation5], %s1037
      %s1039 = sshll.u32 [#allocation8], 4
      %s1040 = int_to_ptr.vmem [resolvable:$true] %s1039
      %1045 = dma.vmem_to_hbm [thread:$0]  %s1040, 8192, %s3, [#allocation5], 128, 128, 8
    $region33: #{tpu_custom_call.1} parent=1 // pred_fallthru
      _
    // Predicated region
    $region34: #{tpu_custom_call.1} parent=1 // pred_check
      _
    $region35: #{tpu_custom_call.1} parent=1 // pred_check_branch
      %1047 = sbr.rel (0) target = $region37
    $region36: #{tpu_custom_call.1} parent=1 // pred_region
      %1048 = dma.done [#allocation5], 8192
    $region37: #{tpu_custom_call.1} parent=1 // pred_fallthru
      _
    %1049 = vsyncpa [#allocation4], 1
    %1050 = vsyncpa [#allocation7], 1
    %1051 = vsyncpa [#allocation5], 1

</llo_original>
